<compile_context>
chip_gen: v7x
topology: tpu7x:2x2x1
jax: 0.10.0
libtpu: 0.0.40
codegen_flags: <defaults>
</compile_context>

<pallas_src>
import functools

import numpy as np

import jax
import jax.numpy as jnp
from jax import lax
from jax.experimental import pallas as pl
from jax.experimental.pallas import tpu as pltpu


# --------------------------------------------------------------------------- #
# Host-side helpers
# --------------------------------------------------------------------------- #
def _moving_avg_matrix(length: int, kernel_size: int) -> np.ndarray:
    """W[i, t] = weight of input position i in the moving average at output t.

    Edge-replication padding (PyTorch `front`/`end` repeats) is folded into the
    first / last rows, so   mean[:, t] = sum_i x[:, i] * W[i, t]   reproduces
    AvgPool1d(kernel_size, stride=1) over the replicated-padded sequence.
    """
    pad = (kernel_size - 1) // 2
    i = np.arange(length)[:, None]   # source (contracted) index
    t = np.arange(length)[None, :]   # output index
    w = ((i >= t - pad) & (i <= t + pad)).astype(np.float64)
    # Window positions that fall off the front replicate x[0]; off the end, x[-1].
    w[0, :] += np.clip(pad - np.arange(length), 0, None)
    w[-1, :] += np.clip(np.arange(length) + pad - (length - 1), 0, None)
    return w / float(kernel_size)


def _ceil_to(n: int, m: int) -> int:
    return -(-n // m) * m


def _tile_padded_bytes(shape, dtype) -> int:
    """VMEM footprint of an array, padded to the (sublane, 128-lane) tile."""
    itemsize = jnp.dtype(dtype).itemsize
    sub = 8 * max(1, 4 // itemsize)          # 8 for f32, 16 for bf16, 32 for i8
    *lead, s, l = shape
    n = 1
    for d in lead:
        n *= d
    return n * _ceil_to(s, sub) * _ceil_to(l, 128) * itemsize


def _vmem_capacity_bytes() -> int:
    try:
        info = pltpu.get_tpu_info()
        for name in ("vmem_capacity_bytes", "vmem_size_bytes", "vmem_bytes"):
            v = getattr(info, name, None)
            if v:
                return int(v)
    except Exception:
        pass
    return 64 * 2**20   # conservative: v7x per-TensorCore VMEM


# --------------------------------------------------------------------------- #
# Kernel
# --------------------------------------------------------------------------- #
def _series_decomp_kernel(x_ref, w_ref, res_ref, mean_ref, *, block_b: int):
    # x_ref:    (block_b, L, c_tile)   input tile, HBM dtype
    # w_ref:    (L, L)                 banded moving-average matrix
    # res_ref / mean_ref: (block_b, c_tile, L)  outputs (permute(0,2,1) fused)
    def body(b, carry):
        # One XLU transpose per batch element (same total XLU work as a single
        # 3-D block transpose, but keeps the matmul strictly 2-D).
        xt = x_ref[b].T                                  # (c_tile, L)
        if xt.dtype != w_ref.dtype:                      # trace-time check
            xt = xt.astype(w_ref.dtype)
        # Moving average = one MXU matmul, f32 accumulation.
        mean = jnp.dot(xt, w_ref[...], preferred_element_type=jnp.float32)
        res = xt.astype(jnp.float32) - mean              # single VPU subtract
        mean_ref[b] = mean.astype(mean_ref.dtype)
        res_ref[b] = res.astype(res_ref.dtype)
        return carry

    lax.fori_loop(0, block_b, body, 0, unroll=True)


# --------------------------------------------------------------------------- #
# Wrapper
# --------------------------------------------------------------------------- #
def series_decomp(x: jax.Array, kernel_size: int, *, max_block_b: int = 8):
    """x: (B, L, C).  Returns (residue, moving_mean), each (B, C, L)."""
    assert x.ndim == 3, "expected (batch, seq_len, channels)"
    assert kernel_size >= 1 and kernel_size % 2 == 1, \
        "odd kernel_size keeps output length == L (as used by SeriesDecomp)"
    B, L, C = x.shape
    itemsize = jnp.dtype(x.dtype).itemsize

    # Banded averaging matrix; bf16 inputs get a bf16 W (MXU-native), everything
    # else gets f32 weights.
    w_dtype = jnp.bfloat16 if x.dtype == jnp.bfloat16 else jnp.float32
    w = jnp.asarray(_moving_avg_matrix(L, kernel_size), dtype=w_dtype)

    # ---- generation-aware VMEM budget (tile-padded accounting) -------------- #
    cap = _vmem_capacity_bytes()
    vmem_limit = min(int(cap * 0.75), 100 * 2**20)   # ~48 MiB v7x, ~96 MiB v5e/v6e
    budget = int(vmem_limit * 0.8)

    def step_vmem(bb: int, ct: int) -> int:
        in_blk = _tile_padded_bytes((bb, L, ct), x.dtype)
        out_blk = _tile_padded_bytes((bb, ct, L), x.dtype)
        w_blk = _tile_padded_bytes((L, L), w_dtype)
        f32_tmp = _tile_padded_bytes((ct, L), jnp.float32)
        # 2x: BlockSpec double-buffers every HBM-backed operand; ~4 f32 temps
        # (xt, mean, res + headroom) live per fori_loop iteration.
        return 2 * in_blk + 2 * (2 * out_blk) + 2 * w_blk + 4 * f32_tmp

    # ---- batch-tile selection ------------------------------------------------ #
    divisors = [d for d in range(1, B + 1) if B % d == 0]
    fitting = [d for d in divisors
               if d <= max_block_b and step_vmem(d, C) <= budget]
    if not fitting:
        fitting = [1]

    # Prefer >=4 grid steps (>=2 per TensorCore on v7x, real pipelining on
    # v5e/v6e) but only when each step still moves >=512 KiB of HBM traffic;
    # otherwise take the largest block that fits (amortizes ~0.35 us/step).
    min_step_hbm = 512 * 1024
    block_b = max(fitting)
    for min_steps in (4, 2):
        cand = [d for d in fitting
                if B // d >= min_steps and 3 * d * L * C * itemsize >= min_step_hbm]
        if cand:
            block_b = max(cand)
            break

    # ---- optional channel tiling for small-batch / wide-channel cases ------- #
    c_tile = C
    n_b = B // block_b
    if n_b < 4 and C % 128 == 0 and C > 128:
        m = C // 128
        want = -(-4 // n_b)   # channel splits needed to reach >=4 total steps
        for k in sorted((d for d in range(1, m + 1) if m % d == 0), reverse=True):
            if m // k >= want:
                c_tile = k * 128
                break
        else:
            c_tile = 128
    n_c = C // c_tile

    need = step_vmem(block_b, c_tile)
    vmem_limit = int(min(cap * 0.9, max(vmem_limit, need * 1.25)))

    kernel = functools.partial(_series_decomp_kernel, block_b=block_b)

    res, mean = pl.pallas_call(
        kernel,
        out_shape=(
            jax.ShapeDtypeStruct((B, C, L), x.dtype),
            jax.ShapeDtypeStruct((B, C, L), x.dtype),
        ),
        grid_spec=pltpu.PrefetchScalarGridSpec(
            num_scalar_prefetch=0,
            grid=(n_b, n_c),
            in_specs=[
                pl.BlockSpec((block_b, L, c_tile), lambda i, j: (i, 0, j)),
                pl.BlockSpec((L, L), lambda i, j: (0, 0)),
            ],
            out_specs=(
                pl.BlockSpec((block_b, c_tile, L), lambda i, j: (i, j, 0)),
                pl.BlockSpec((block_b, c_tile, L), lambda i, j: (i, j, 0)),
            ),
        ),
        compiler_params=pltpu.CompilerParams(
            dimension_semantics=("parallel", "parallel"),
            vmem_limit_bytes=vmem_limit,
        ),
    )(x, w)
    return res, mean


# --------------------------------------------------------------------------- #
# Pure-JAX reference (mirrors the PyTorch module; outputs in (B, C, L))
# --------------------------------------------------------------------------- #
def _reference(x, kernel_size):
    pad = (kernel_size - 1) // 2
    front = jnp.repeat(x[:, :1, :], pad, axis=1)
    end = jnp.repeat(x[:, -1:, :], pad, axis=1)
    xp = jnp.concatenate([front, x, end], axis=1)            # (B, L+2p, C)
    L = x.shape[1]
    mean = jnp.mean(
        jnp.stack([xp[:, j:j + L, :] for j in range(kernel_size)], axis=0),
        axis=0,
    )
    res = x - mean
    return jnp.transpose(res, (0, 2, 1)), jnp.transpose(mean, (0, 2, 1))


def _check(B, L, C, kernel_size, key, dtype=jnp.float32, tol=5e-3):
    x = jax.random.normal(key, (B, L, C), dtype=jnp.float32)
    # Quantize the test inputs to bf16-exact values so the tolerance does not
    # have to absorb operand rounding if the MXU evaluates the f32 matmul via
    # bf16 passes; a logic error would still produce O(0.1) discrepancies.
    x = x.astype(jnp.bfloat16).astype(dtype)

    res, mean = series_decomp(x, kernel_size)
    jax.block_until_ready((res, mean))

    res_ref, mean_ref = _reference(x.astype(jnp.float32), kernel_size)
    assert res.shape == (B, C, L) and mean.shape == (B, C, L)
    assert jnp.allclose(res.astype(jnp.float32), res_ref, atol=tol, rtol=tol)
    assert jnp.allclose(mean.astype(jnp.float32), mean_ref, atol=tol, rtol=tol)


if __name__ == "__main__":
    key = jax.random.PRNGKey(0)
    k0, k1, k2, k3 = jax.random.split(key, 4)

    # Shapes consistent with the module's forward: (batch, seq_len, channels).
    _check(B=2, L=16, C=8, kernel_size=5, key=k0)                 # basic
    _check(B=4, L=32, C=7, kernel_size=25, key=k1)                # odd C, wide window
    _check(B=1, L=128, C=256, kernel_size=9, key=k2)              # channel-tiled grid
    _check(B=2, L=64, C=16, kernel_size=7, key=k3,
           dtype=jnp.bfloat16, tol=3e-2)                          # bf16 fast path

    print("KERNEL_OK")
</pallas_src>

<mosaic_0001>
module attributes {stable_mosaic.version = 11 : i64} {
  func.func @_series_decomp_kernel(%arg0: i32, %arg1: i32, %arg2: memref<2x16x8xf32, #tpu.memory_space<vmem>>, %arg3: memref<16x16xf32, #tpu.memory_space<vmem>>, %arg4: memref<2x8x16xf32, #tpu.memory_space<vmem>>, %arg5: memref<2x8x16xf32, #tpu.memory_space<vmem>>) attributes {dimension_semantics = [#tpu.dimension_semantics<parallel>, #tpu.dimension_semantics<parallel>], iteration_bounds = array<i64: 1, 1>, scalar_prefetch = 0 : i64, scratch_operands = 0 : i64, tpu.core_type = #tpu.core_type<tc>, window_params = [{transform_indices = @transform_0, window_bounds = array<i64: 2, 16, 8>}, {pipeline_mode = #tpu.pipeline_mode<synchronous>, transform_indices = @transform_1, window_bounds = array<i64: 16, 16>}, {transform_indices = @transform_2, window_bounds = array<i64: 2, 8, 16>}, {transform_indices = @transform_3, window_bounds = array<i64: 2, 8, 16>}]} {
    %c0_i32 = arith.constant 0 : i32
    %0 = arith.index_cast %c0_i32 : i32 to index
    %c0 = arith.constant 0 : index
    %c0_0 = arith.constant 0 : index
    %1 = vector.load %arg2[%0, %c0, %c0_0] : memref<2x16x8xf32, #tpu.memory_space<vmem>>, vector<1x16x8xf32>
    %2 = vector.shape_cast %1 : vector<1x16x8xf32> to vector<16x8xf32>
    %3 = tpu.transpose %2, [1, 0] : vector<16x8xf32> -> vector<8x16xf32>
    %c0_1 = arith.constant 0 : index
    %c0_2 = arith.constant 0 : index
    %4 = vector.load %arg3[%c0_1, %c0_2] : memref<16x16xf32, #tpu.memory_space<vmem>>, vector<16x16xf32>
    %cst = arith.constant dense<0.000000e+00> : vector<8x16xf32>
    %5 = tpu.matmul %3, %4, %cst {dimension_numbers = #tpu.dot_dimension_numbers<[1], [0], [0], [1], [0, 0, 1, 1], [], []>} : vector<8x16xf32>, vector<16x16xf32>, vector<8x16xf32> -> vector<8x16xf32>
    %6 = arith.subf %3, %5 : vector<8x16xf32>
    %7 = arith.index_cast %c0_i32 : i32 to index
    %c0_3 = arith.constant 0 : index
    %c0_4 = arith.constant 0 : index
    %8 = vector.load %arg5[%7, %c0_3, %c0_4] : memref<2x8x16xf32, #tpu.memory_space<vmem>>, vector<1x8x16xf32>
    %9 = vector.shape_cast %8 : vector<1x8x16xf32> to vector<8x16xf32>
    %10 = vector.shape_cast %5 : vector<8x16xf32> to vector<1x8x16xf32>
    tpu.vector_store %arg5[%7, %c0_3, %c0_4], %10 {strides = array<i32>} : memref<2x8x16xf32, #tpu.memory_space<vmem>>, vector<1x8x16xf32>,
    %11 = arith.index_cast %c0_i32 : i32 to index
    %c0_5 = arith.constant 0 : index
    %c0_6 = arith.constant 0 : index
    %12 = vector.load %arg4[%11, %c0_5, %c0_6] : memref<2x8x16xf32, #tpu.memory_space<vmem>>, vector<1x8x16xf32>
    %13 = vector.shape_cast %12 : vector<1x8x16xf32> to vector<8x16xf32>
    %14 = vector.shape_cast %6 : vector<8x16xf32> to vector<1x8x16xf32>
    tpu.vector_store %arg4[%11, %c0_5, %c0_6], %14 {strides = array<i32>} : memref<2x8x16xf32, #tpu.memory_space<vmem>>, vector<1x8x16xf32>,
    %c1_i32 = arith.constant 1 : i32
    %15 = arith.index_cast %c1_i32 : i32 to index
    %c0_7 = arith.constant 0 : index
    %c0_8 = arith.constant 0 : index
    %16 = vector.load %arg2[%15, %c0_7, %c0_8] : memref<2x16x8xf32, #tpu.memory_space<vmem>>, vector<1x16x8xf32>
    %17 = vector.shape_cast %16 : vector<1x16x8xf32> to vector<16x8xf32>
    %18 = tpu.transpose %17, [1, 0] : vector<16x8xf32> -> vector<8x16xf32>
    %c0_9 = arith.constant 0 : index
    %c0_10 = arith.constant 0 : index
    %19 = vector.load %arg3[%c0_9, %c0_10] : memref<16x16xf32, #tpu.memory_space<vmem>>, vector<16x16xf32>
    %cst_11 = arith.constant dense<0.000000e+00> : vector<8x16xf32>
    %20 = tpu.matmul %18, %19, %cst_11 {dimension_numbers = #tpu.dot_dimension_numbers<[1], [0], [0], [1], [0, 0, 1, 1], [], []>} : vector<8x16xf32>, vector<16x16xf32>, vector<8x16xf32> -> vector<8x16xf32>
    %21 = arith.subf %18, %20 : vector<8x16xf32>
    %22 = arith.index_cast %c1_i32 : i32 to index
    %c0_12 = arith.constant 0 : index
    %c0_13 = arith.constant 0 : index
    %23 = vector.load %arg5[%22, %c0_12, %c0_13] : memref<2x8x16xf32, #tpu.memory_space<vmem>>, vector<1x8x16xf32>
    %24 = vector.shape_cast %23 : vector<1x8x16xf32> to vector<8x16xf32>
    %25 = vector.shape_cast %20 : vector<8x16xf32> to vector<1x8x16xf32>
    tpu.vector_store %arg5[%22, %c0_12, %c0_13], %25 {strides = array<i32>} : memref<2x8x16xf32, #tpu.memory_space<vmem>>, vector<1x8x16xf32>,
    %26 = arith.index_cast %c1_i32 : i32 to index
    %c0_14 = arith.constant 0 : index
    %c0_15 = arith.constant 0 : index
    %27 = vector.load %arg4[%26, %c0_14, %c0_15] : memref<2x8x16xf32, #tpu.memory_space<vmem>>, vector<1x8x16xf32>
    %28 = vector.shape_cast %27 : vector<1x8x16xf32> to vector<8x16xf32>
    %29 = vector.shape_cast %21 : vector<8x16xf32> to vector<1x8x16xf32>
    tpu.vector_store %arg4[%26, %c0_14, %c0_15], %29 {strides = array<i32>} : memref<2x8x16xf32, #tpu.memory_space<vmem>>, vector<1x8x16xf32>,
    %c2_i32 = arith.constant 2 : i32
    return
  }
  func.func @transform_0(%arg0: i32, %arg1: i32) -> (i32, i32, i32) {
    %c0_i32 = arith.constant 0 : i32
    %c0_i32_0 = arith.constant 0 : i32
    return %arg0, %c0_i32, %arg1 : i32, i32, i32
  }
  func.func @transform_1(%arg0: i32, %arg1: i32) -> (i32, i32) {
    %c0_i32 = arith.constant 0 : i32
    %c0_i32_0 = arith.constant 0 : i32
    %c0_i32_1 = arith.constant 0 : i32
    return %c0_i32, %c0_i32_0 : i32, i32
  }
  func.func @transform_2(%arg0: i32, %arg1: i32) -> (i32, i32, i32) {
    %c0_i32 = arith.constant 0 : i32
    %c0_i32_0 = arith.constant 0 : i32
    return %arg0, %arg1, %c0_i32 : i32, i32, i32
  }
  func.func @transform_3(%arg0: i32, %arg1: i32) -> (i32, i32, i32) {
    %c0_i32 = arith.constant 0 : i32
    %c0_i32_0 = arith.constant 0 : i32
    return %arg0, %arg1, %c0_i32 : i32, i32, i32
  }
}

</mosaic_0001>

<llo_original>
// kernel: tpu_custom_call.1
$region0: #{tpu_custom_call.1}
  #allocation0 [shape = 'u32[]', space=smem, size = 0x4, offset = 0x4, fixed_abs, tag = 'smem constant byte address 0x4 - core index']
  #allocation1 [shape = 'u32[144,128]{1,0:T(1,128)}', space=vmem, size = 0x12000, scoped, tag = 'internal scratch']
  %s0 = inlined_call_operand.vmem [shape: f32[2,16,8], index: 0, kind: input, shape index: {}]
  %s1 = inlined_call_operand.vmem [shape: f32[16,16], index: 1, kind: input, shape index: {}]
  %s2 = inlined_call_operand.hbm [shape: f32[2,8,16], index: 2, kind: output, shape index: {0}]
  %s3 = inlined_call_operand.hbm [shape: f32[2,8,16], index: 3, kind: output, shape index: {1}]
  %4 = xla_tuple %s2, %s3
  %s5 = sld [smem:[#allocation0]]
  $region26: #{tpu_custom_call.1} parent=0
    _
  %s7 = ssub.s32 1, %s5
  %s8 = scalar_select 0, %s7, %s5
  $region1: #{tpu_custom_call.1} parent=0
    #allocation2 [shape = 'u8[8192]{0}', space=vmem, size = 0x2000, scoped, tag = 'output window, operand 0, single buffered']
    #allocation3 [shape = 's32[1]{0}', space=sflag, size = 0x4, scoped, tag = 'scoped memory for tpu_custom_call.1']
    #allocation4 [shape = 'u8[8192]{0}', space=vmem, size = 0x2000, scoped, tag = 'output window, operand 1, single buffered']
    #allocation5 [shape = 's32[1]{0}', space=sflag, size = 0x4, scoped, tag = 'scoped memory for tpu_custom_call.1']
    %9 = vsyncpa [#allocation3], 0
    %10 = vsyncpa [#allocation5], 0
    // Predicated region
    $region2: #{tpu_custom_call.1} parent=1 // pred_check
      _
    $region3: #{tpu_custom_call.1} parent=1 // pred_check_branch
      %12 = sbr.rel (0) target = $region5
    $region4: #{tpu_custom_call.1} parent=1 // pred_region
      _
    $region5: #{tpu_custom_call.1} parent=1 // pred_fallthru
      _
    // Predicated region
    $region6: #{tpu_custom_call.1} parent=1 // pred_check
      _
    $region7: #{tpu_custom_call.1} parent=1 // pred_check_branch
      %14 = sbr.rel (0) target = $region9
    $region8: #{tpu_custom_call.1} parent=1 // pred_region
      _
    $region9: #{tpu_custom_call.1} parent=1 // pred_fallthru
      _
    %v15 = vld [vmem:[%s0] sm:$0xff]
    %v16 = vld [vmem:[%s0 + $0x8] sm:$0xff]
    %17 = vxpose.xlu0.b32.start [1/16] %v15, 128
    %18 = vxpose.xlu0.b32.cont [2/16] %v16, 128
    %19 = vxpose.xlu0.b32.cont [3/16] 0.0, 128
    %20 = vxpose.xlu0.b32.cont [4/16] 0.0, 128
    %21 = vxpose.xlu0.b32.cont [5/16] 0.0, 128
    %22 = vxpose.xlu0.b32.cont [6/16] 0.0, 128
    %23 = vxpose.xlu0.b32.cont [7/16] 0.0, 128
    %24 = vxpose.xlu0.b32.cont [8/16] 0.0, 128
    %25 = vxpose.xlu0.b32.cont [9/16] 0.0, 128
    %26 = vxpose.xlu0.b32.cont [10/16] 0.0, 128
    %27 = vxpose.xlu0.b32.cont [11/16] 0.0, 128
    %28 = vxpose.xlu0.b32.cont [12/16] 0.0, 128
    %29 = vxpose.xlu0.b32.cont [13/16] 0.0, 128
    %30 = vxpose.xlu0.b32.cont [14/16] 0.0, 128
    %31 = vxpose.xlu0.b32.cont [15/16] 0.0, 128
    %32 = vxpose.xlu0.b32.end [16/16] 0.0, 128
    %v33 = vpop.trf.xlu0
    %v34 = vpop.trf.xlu0
    %v35 = vpop.trf.xlu0
    %v36 = vpop.trf.xlu0
    %v37 = vpop.trf.xlu0
    %v38 = vpop.trf.xlu0
    %v39 = vpop.trf.xlu0
    %v40 = vpop.trf.xlu0
    %v41 = vpop.trf.xlu0
    %v42 = vpop.trf.xlu0
    %v43 = vpop.trf.xlu0
    %v44 = vpop.trf.xlu0
    %v45 = vpop.trf.xlu0
    %v46 = vpop.trf.xlu0
    %v47 = vpop.trf.xlu0
    %v48 = vpop.trf.xlu0
    %v49 = vld [vmem:[%s1] sm:$0xff]
    %v50 = vld [vmem:[%s1 + $0x8] sm:$0xff]
    %vm51 = vcmask 130048
    %v53 = vsel %vm51, %v33, 0
    %55 = vmatprep.subr.mxu0 0.0
    %56 = vmatpush1.msra.mxu0 %v49
    %57 = vmatprep.subr.mxu0 0.0
    %58 = vmatpush1.msra.mxu0 %v50
    %59 = vmatprep.subr.mxu0 0.0
    %60 = vmatpush1.msra.mxu0 0.0
    %61 = vmatprep.subr.mxu0 0.0
    %62 = vmatpush1.msra.mxu0 0.0
    %63 = vmatprep.subr.mxu0 0.0
    %64 = vmatpush1.msra.mxu0 0.0
    %65 = vmatprep.subr.mxu0 0.0
    %66 = vmatpush1.msra.mxu0 0.0
    %67 = vmatprep.subr.mxu0 0.0
    %68 = vmatpush1.msra.mxu0 0.0
    %69 = vmatprep.subr.mxu0 0.0
    %70 = vmatpush1.msra.mxu0 0.0
    %71 = vmatprep.subr.mxu0 0.0
    %72 = vmatpush1.msra.mxu0 0.0
    %73 = vmatprep.subr.mxu0 0.0
    %74 = vmatpush1.msra.mxu0 0.0
    %75 = vmatprep.subr.mxu0 0.0
    %76 = vmatpush1.msra.mxu0 0.0
    %77 = vmatprep.subr.mxu0 0.0
    %78 = vmatpush1.msra.mxu0 0.0
    %79 = vmatprep.subr.mxu0 0.0
    %80 = vmatpush1.msra.mxu0 0.0
    %81 = vmatprep.subr.mxu0 0.0
    %82 = vmatpush1.msra.mxu0 0.0
    %83 = vmatprep.subr.mxu0 0.0
    %84 = vmatpush1.msra.mxu0 0.0
    %85 = vmatprep.subr.mxu0 0.0
    %86 = vmatpush1.msra.mxu0 0.0
    %87 = vmatprep.subr.mxu0 0.0
    %88 = vmatpush1.msra.mxu0 0.0
    %89 = vmatprep.subr.mxu0 0.0
    %90 = vmatpush1.msra.mxu0 0.0
    %91 = vmatprep.subr.mxu0 0.0
    %92 = vmatpush1.msra.mxu0 0.0
    %93 = vmatprep.subr.mxu0 0.0
    %94 = vmatpush1.msra.mxu0 0.0
    %95 = vmatprep.subr.mxu0 0.0
    %96 = vmatpush1.msra.mxu0 0.0
    %97 = vmatprep.subr.mxu0 0.0
    %98 = vmatpush1.msra.mxu0 0.0
    %99 = vmatprep.subr.mxu0 0.0
    %100 = vmatpush1.msra.mxu0 0.0
    %101 = vmatprep.subr.mxu0 0.0
    %102 = vmatpush1.msra.mxu0 0.0
    %103 = vmatprep.subr.mxu0 0.0
    %104 = vmatpush1.msra.mxu0 0.0
    %105 = vmatprep.subr.mxu0 0.0
    %106 = vmatpush1.msra.mxu0 0.0
    %107 = vmatprep.subr.mxu0 0.0
    %108 = vmatpush1.msra.mxu0 0.0
    %109 = vmatprep.subr.mxu0 0.0
    %110 = vmatpush1.msra.mxu0 0.0
    %111 = vmatprep.subr.mxu0 0.0
    %112 = vmatpush1.msra.mxu0 0.0
    %113 = vmatprep.subr.mxu0 0.0
    %114 = vmatpush1.msra.mxu0 0.0
    %115 = vmatprep.subr.mxu0 0.0
    %116 = vmatpush1.msra.mxu0 0.0
    %117 = vmatprep.subr.mxu0 0.0
    %118 = vmatpush1.msra.mxu0 0.0
    %119 = vmatprep.mubr.f32.mxu0 0.0
    %120 = vmatmul.mubr.f32.gmra.mrb[0].mxu0 %v53
    %v121 = vpop.f32.mrb[0].mxu0
    %v122 = vadd.f32 0.0, %v121
    %v123 = vpop.f32.mrb[0].mxu0
    %124 = vdwg.mxu0
    %v125 = vsub.f32 %v33, %v122
    %126 = vst.msk [vmem:[#allocation4] sm:$0xff] %vm51, %v122
    %127 = vst.msk [vmem:[#allocation2] sm:$0xff] %vm51, %v125
    %s128 = scalar_lea.vmem %s0, 16
    %v129 = vld [vmem:[%s128] sm:$0xff]
    %v130 = vld [vmem:[%s128 + $0x8] sm:$0xff]
    %131 = vxpose.xlu0.b32.start [1/16] %v129, 128
    %132 = vxpose.xlu0.b32.cont [2/16] %v130, 128
    %133 = vxpose.xlu0.b32.cont [3/16] 0.0, 128
    %134 = vxpose.xlu0.b32.cont [4/16] 0.0, 128
    %135 = vxpose.xlu0.b32.cont [5/16] 0.0, 128
    %136 = vxpose.xlu0.b32.cont [6/16] 0.0, 128
    %137 = vxpose.xlu0.b32.cont [7/16] 0.0, 128
    %138 = vxpose.xlu0.b32.cont [8/16] 0.0, 128
    %139 = vxpose.xlu0.b32.cont [9/16] 0.0, 128
    %140 = vxpose.xlu0.b32.cont [10/16] 0.0, 128
    %141 = vxpose.xlu0.b32.cont [11/16] 0.0, 128
    %142 = vxpose.xlu0.b32.cont [12/16] 0.0, 128
    %143 = vxpose.xlu0.b32.cont [13/16] 0.0, 128
    %144 = vxpose.xlu0.b32.cont [14/16] 0.0, 128
    %145 = vxpose.xlu0.b32.cont [15/16] 0.0, 128
    %146 = vxpose.xlu0.b32.end [16/16] 0.0, 128
    %v147 = vpop.trf.xlu0
    %v148 = vpop.trf.xlu0
    %v149 = vpop.trf.xlu0
    %v150 = vpop.trf.xlu0
    %v151 = vpop.trf.xlu0
    %v152 = vpop.trf.xlu0
    %v153 = vpop.trf.xlu0
    %v154 = vpop.trf.xlu0
    %v155 = vpop.trf.xlu0
    %v156 = vpop.trf.xlu0
    %v157 = vpop.trf.xlu0
    %v158 = vpop.trf.xlu0
    %v159 = vpop.trf.xlu0
    %v160 = vpop.trf.xlu0
    %v161 = vpop.trf.xlu0
    %v162 = vpop.trf.xlu0
    %v163 = vld [vmem:[%s1] sm:$0xff]
    %v164 = vld [vmem:[%s1 + $0x8] sm:$0xff]
    %v166 = vsel %vm51, %v147, 0
    %168 = vmatprep.subr.mxu0 0.0
    %169 = vmatpush1.msra.mxu0 %v163
    %170 = vmatprep.subr.mxu0 0.0
    %171 = vmatpush1.msra.mxu0 %v164
    %172 = vmatprep.subr.mxu0 0.0
    %173 = vmatpush1.msra.mxu0 0.0
    %174 = vmatprep.subr.mxu0 0.0
    %175 = vmatpush1.msra.mxu0 0.0
    %176 = vmatprep.subr.mxu0 0.0
    %177 = vmatpush1.msra.mxu0 0.0
    %178 = vmatprep.subr.mxu0 0.0
    %179 = vmatpush1.msra.mxu0 0.0
    %180 = vmatprep.subr.mxu0 0.0
    %181 = vmatpush1.msra.mxu0 0.0
    %182 = vmatprep.subr.mxu0 0.0
    %183 = vmatpush1.msra.mxu0 0.0
    %184 = vmatprep.subr.mxu0 0.0
    %185 = vmatpush1.msra.mxu0 0.0
    %186 = vmatprep.subr.mxu0 0.0
    %187 = vmatpush1.msra.mxu0 0.0
    %188 = vmatprep.subr.mxu0 0.0
    %189 = vmatpush1.msra.mxu0 0.0
    %190 = vmatprep.subr.mxu0 0.0
    %191 = vmatpush1.msra.mxu0 0.0
    %192 = vmatprep.subr.mxu0 0.0
    %193 = vmatpush1.msra.mxu0 0.0
    %194 = vmatprep.subr.mxu0 0.0
    %195 = vmatpush1.msra.mxu0 0.0
    %196 = vmatprep.subr.mxu0 0.0
    %197 = vmatpush1.msra.mxu0 0.0
    %198 = vmatprep.subr.mxu0 0.0
    %199 = vmatpush1.msra.mxu0 0.0
    %200 = vmatprep.subr.mxu0 0.0
    %201 = vmatpush1.msra.mxu0 0.0
    %202 = vmatprep.subr.mxu0 0.0
    %203 = vmatpush1.msra.mxu0 0.0
    %204 = vmatprep.subr.mxu0 0.0
    %205 = vmatpush1.msra.mxu0 0.0
    %206 = vmatprep.subr.mxu0 0.0
    %207 = vmatpush1.msra.mxu0 0.0
    %208 = vmatprep.subr.mxu0 0.0
    %209 = vmatpush1.msra.mxu0 0.0
    %210 = vmatprep.subr.mxu0 0.0
    %211 = vmatpush1.msra.mxu0 0.0
    %212 = vmatprep.subr.mxu0 0.0
    %213 = vmatpush1.msra.mxu0 0.0
    %214 = vmatprep.subr.mxu0 0.0
    %215 = vmatpush1.msra.mxu0 0.0
    %216 = vmatprep.subr.mxu0 0.0
    %217 = vmatpush1.msra.mxu0 0.0
    %218 = vmatprep.subr.mxu0 0.0
    %219 = vmatpush1.msra.mxu0 0.0
    %220 = vmatprep.subr.mxu0 0.0
    %221 = vmatpush1.msra.mxu0 0.0
    %222 = vmatprep.subr.mxu0 0.0
    %223 = vmatpush1.msra.mxu0 0.0
    %224 = vmatprep.subr.mxu0 0.0
    %225 = vmatpush1.msra.mxu0 0.0
    %226 = vmatprep.subr.mxu0 0.0
    %227 = vmatpush1.msra.mxu0 0.0
    %228 = vmatprep.subr.mxu0 0.0
    %229 = vmatpush1.msra.mxu0 0.0
    %230 = vmatprep.subr.mxu0 0.0
    %231 = vmatpush1.msra.mxu0 0.0
    %232 = vmatprep.mubr.f32.mxu0 0.0
    %233 = vmatmul.mubr.f32.gmra.mrb[0].mxu0 %v166
    %v234 = vpop.f32.mrb[0].mxu0
    %v235 = vadd.f32 0.0, %v234
    %v236 = vpop.f32.mrb[0].mxu0
    %237 = vdwg.mxu0
    %v238 = vsub.f32 %v147, %v235
    %s239 = scalar_lea.vmem [#allocation4], 8
    %240 = vst.msk [vmem:[%s239] sm:$0xff] %vm51, %v235
    %s241 = scalar_lea.vmem [#allocation2], 8
    %242 = vst.msk [vmem:[%s241] sm:$0xff] %vm51, %v238
    // Predicated region
    $region10: #{tpu_custom_call.1} parent=1 // pred_check
      _
    $region11: #{tpu_custom_call.1} parent=1 // pred_check_branch
      %244 = sbr.rel (0) target = $region13
    $region12: #{tpu_custom_call.1} parent=1 // pred_region
      %s246 = ssub.s32 256, 256
      %247 = vsyncadd [#allocation3], %s246
      %s248 = sshll.u32 [#allocation2], 4
      %s249 = int_to_ptr.vmem [resolvable:$true] %s248
      %254 = dma.vmem_to_hbm [thread:$0]  %s249, 256, %s2, [#allocation3], 128, 128, 8
    $region13: #{tpu_custom_call.1} parent=1 // pred_fallthru
      _
    // Predicated region
    $region14: #{tpu_custom_call.1} parent=1 // pred_check
      _
    $region15: #{tpu_custom_call.1} parent=1 // pred_check_branch
      %256 = sbr.rel (0) target = $region17
    $region16: #{tpu_custom_call.1} parent=1 // pred_region
      %s258 = ssub.s32 256, 256
      %259 = vsyncadd [#allocation5], %s258
      %s260 = sshll.u32 [#allocation4], 4
      %s261 = int_to_ptr.vmem [resolvable:$true] %s260
      %266 = dma.vmem_to_hbm [thread:$0]  %s261, 256, %s3, [#allocation5], 128, 128, 8
    $region17: #{tpu_custom_call.1} parent=1 // pred_fallthru
      _
    // Predicated region
    $region18: #{tpu_custom_call.1} parent=1 // pred_check
      _
    $region19: #{tpu_custom_call.1} parent=1 // pred_check_branch
      %268 = sbr.rel (0) target = $region21
    $region20: #{tpu_custom_call.1} parent=1 // pred_region
      %269 = dma.done [#allocation3], 256
    $region21: #{tpu_custom_call.1} parent=1 // pred_fallthru
      _
    // Predicated region
    $region22: #{tpu_custom_call.1} parent=1 // pred_check
      _
    $region23: #{tpu_custom_call.1} parent=1 // pred_check_branch
      %271 = sbr.rel (0) target = $region25
    $region24: #{tpu_custom_call.1} parent=1 // pred_region
      %272 = dma.done [#allocation5], 256
    $region25: #{tpu_custom_call.1} parent=1 // pred_fallthru
      _
    %273 = vsyncpa [#allocation3], 1
    %274 = vsyncpa [#allocation5], 1

</llo_original>
